<compile_context>
chip_gen: v7x
topology: tpu7x:2x2x1
jax: 0.10.0
libtpu: 0.0.40
codegen_flags: <defaults>
</compile_context>

<pallas_src>
import functools

import jax
import jax.numpy as jnp
from jax.experimental import pallas as pl
from jax.experimental.pallas import tpu as pltpu


def _gelu(x, approximate=True):
    if approximate:
        return jax.nn.gelu(x, approximate=True)          # tanh form -> EUP slot
    # PyTorch nn.GELU() default = exact erf formulation (VALU polynomial).
    return 0.5 * x * (1.0 + jax.lax.erf(x * (1.0 / jnp.sqrt(2.0))))


def mil_abmil_kernel(x_ref, w1_ref, b1_ref, wa_ref, ba_ref, wv_ref,
                     wp_ref, bp_ref, out_ref, m_sc, l_sc, acc_sc,
                     *, tile_n, n_valid, needs_mask, approximate_gelu):
    """One grid step == one (bag, patch-tile).  Online softmax over the patch
    tiles; running max m, denom l and weighted sum acc live in VMEM scratch."""
    n = pl.program_id(1)

    @pl.when(n == 0)
    def _init():
        m_sc[...] = jnp.full_like(m_sc, -jnp.inf)
        l_sc[...] = jnp.zeros_like(l_sc)
        acc_sc[...] = jnp.zeros_like(acc_sc)

    x = x_ref[0]                                                 # (TN, D_in) bf16

    # patch_to_emb: Linear(D_in, mlp) + GELU.  bf16 MXU, f32 accumulation.
    h = jnp.dot(x, w1_ref[...], preferred_element_type=jnp.float32)
    h = _gelu(h + b1_ref[...], approximate=approximate_gelu)     # (TN, mlp) f32

    # ABMIL attention head: Linear(mlp, D_att) -> tanh -> Linear(D_att, 1).
    ah = jnp.dot(h.astype(jnp.bfloat16), wa_ref[...],
                 preferred_element_type=jnp.float32)
    ah = jnp.tanh(ah + ba_ref[...])                              # (TN, D_att) f32
    # 1-wide output column: VPU multiply + lane reduction, keep the MXU free.
    scores = jnp.sum(ah * wv_ref[...], axis=-1, keepdims=True)   # (TN, 1)
    # bv intentionally dropped: a uniform shift cancels in the softmax.

    if needs_mask:
        # Patches past the true bag length (zero-padding) get -inf scores.
        row = jax.lax.broadcasted_iota(jnp.int32, (tile_n, 1), 0)
        scores = jnp.where(n * tile_n + row < n_valid, scores, -jnp.inf)

    # Online softmax update over the patch axis.
    m_prev = m_sc[...]                                           # (1, 1)
    m_new = jnp.maximum(m_prev, jnp.max(scores, axis=0, keepdims=True))
    alpha = jnp.exp(m_prev - m_new)                              # (1, 1)
    p = jnp.exp(scores - m_new)                                  # (TN, 1)

    l_sc[...] = alpha * l_sc[...] + jnp.sum(p, axis=0, keepdims=True)
    # Attention-weighted sum of patch embeddings on the MXU (contract TN).
    z_part = jax.lax.dot_general(p, h, (((0,), (0,)), ((), ())),
                                 preferred_element_type=jnp.float32)  # (1, mlp)
    acc_sc[...] = alpha * acc_sc[...] + z_part
    m_sc[...] = m_new

    @pl.when(n == pl.num_programs(1) - 1)
    def _finalize():
        z = acc_sc[...] / l_sc[...]                              # exact divide
        logits = jnp.dot(z, wp_ref[...], preferred_element_type=jnp.float32)
        out_ref[0] = (logits + bp_ref[...]).astype(out_ref.dtype)


def _round_up(x, m):
    return (x + m - 1) // m * m


def _vmem_capacity_bytes():
    try:
        cap = getattr(pltpu.get_tpu_info(), "vmem_capacity_bytes", None)
        if cap:
            return int(cap)
    except Exception:
        pass
    return 64 * 1024 * 1024          # conservative: assume a 64-MiB (v7x) part


def _choose_tile_n(n, cap):
    """Patch tile: multiple of 16 (bf16 sublane packing), <= cap, min padding."""
    n16 = _round_up(n, 16)
    if n16 <= cap:
        return n16
    n_tiles = -(-n // cap)
    return _round_up(-(-n // n_tiles), 16)


def mil_abmil_forward(x, params, *, tile_n=None, approximate_gelu=True):
    """x: (B, N, D_in) float32.  Returns logits (B, 1, n_classes) float32."""
    B, N, D_in = x.shape
    w1, b1 = params["w1"], params["b1"]
    wa, ba = params["wa"], params["ba"]
    wv = params["wv"]
    wp, bp = params["wp"], params["bp"]
    mlp = w1.shape[1]
    d_att = wa.shape[1]
    n_classes = wp.shape[1]

    # Generation-gated budgets: 128-MiB VMEM parts (v5e/v6e) take bigger patch
    # tiles and a higher scoped-VMEM limit than 64-MiB (v7x-class) parts.
    if _vmem_capacity_bytes() >= 100 * 1024 * 1024:
        tile_cap, vmem_limit = 2048, 96 * 1024 * 1024
    else:
        tile_cap, vmem_limit = 1024, 48 * 1024 * 1024

    if tile_n is None:
        tile_n = _choose_tile_n(N, tile_cap)
    else:
        tile_n = _round_up(int(tile_n), 16)
    n_tiles = -(-N // tile_n)
    n_pad = n_tiles * tile_n
    needs_mask = n_pad != N

    if needs_mask:
        x = jnp.pad(x, ((0, 0), (0, n_pad - N), (0, 0)))

    # bf16 activation/weight stream for the MXU; biases and predictor stay f32.
    x_bf = x.astype(jnp.bfloat16)
    w1_bf = w1.astype(jnp.bfloat16)
    wa_bf = wa.astype(jnp.bfloat16)
    b1_f = b1.reshape(1, mlp).astype(jnp.float32)
    ba_f = ba.reshape(1, d_att).astype(jnp.float32)
    wv_row = wv.reshape(1, d_att).astype(jnp.float32)   # score proj = lane reduce
    wp_f = wp.astype(jnp.float32)
    bp_f = bp.reshape(1, n_classes).astype(jnp.float32)

    def resident(shape):
        # Constant block index -> fetched once, resident in VMEM for the grid.
        return pl.BlockSpec(shape, lambda b, n: tuple(0 for _ in shape))

    grid_spec = pltpu.PrefetchScalarGridSpec(
        num_scalar_prefetch=0,
        grid=(B, n_tiles),
        in_specs=[
            pl.BlockSpec((1, tile_n, D_in), lambda b, n: (b, n, 0)),   # x tile
            resident((D_in, mlp)),                                     # W1 bf16
            resident((1, mlp)),                                        # b1
            resident((mlp, d_att)),                                    # Wa bf16
            resident((1, d_att)),                                      # ba
            resident((1, d_att)),                                      # Wv row
            resident((mlp, n_classes)),                                # Wp
            resident((1, n_classes)),                                  # bp
        ],
        # Output block is resident across the n (reduction) axis; only the
        # last n-tile writes it.
        out_specs=pl.BlockSpec((1, 1, n_classes), lambda b, n: (b, 0, 0)),
        scratch_shapes=[
            pltpu.VMEM((1, 1), jnp.float32),      # running max m
            pltpu.VMEM((1, 1), jnp.float32),      # running denom l
            pltpu.VMEM((1, mlp), jnp.float32),    # running weighted sum acc
        ],
    )

    flops = (2 * B * n_pad * D_in * mlp          # patch_to_emb matmul
             + 2 * B * n_pad * mlp * d_att       # attention inner matmul
             + 2 * B * n_pad * d_att             # score lane reduce
             + 2 * B * n_pad * mlp               # attn-weighted sum
             + 2 * B * mlp * n_classes)          # predictor
    transcendentals = B * n_pad * (mlp + d_att + 1)
    bytes_accessed = (2 * B * n_pad * D_in                      # bf16 x stream
                      + 2 * (D_in * mlp + mlp * d_att)          # bf16 weights
                      + 4 * (mlp + 2 * d_att + mlp * n_classes
                             + n_classes + B * n_classes))

    kernel = functools.partial(
        mil_abmil_kernel, tile_n=tile_n, n_valid=N, needs_mask=needs_mask,
        approximate_gelu=approximate_gelu)

    return pl.pallas_call(
        kernel,
        out_shape=jax.ShapeDtypeStruct((B, 1, n_classes), jnp.float32),
        grid_spec=grid_spec,
        compiler_params=pltpu.CompilerParams(
            dimension_semantics=("parallel", "arbitrary"),
            vmem_limit_bytes=vmem_limit),
        cost_estimate=pl.CostEstimate(flops=flops,
                                      transcendentals=transcendentals,
                                      bytes_accessed=bytes_accessed),
    )(x_bf, w1_bf, b1_f, wa_bf, ba_f, wv_row, wp_f, bp_f)


def init_params(key, d_in, mlp, d_att, n_classes):
    ks = jax.random.split(key, 8)
    s = lambda fan_in: 1.0 / jnp.sqrt(fan_in)
    return {
        "w1": jax.random.normal(ks[0], (d_in, mlp), jnp.float32) * s(d_in),
        "b1": jax.random.normal(ks[1], (1, mlp), jnp.float32) * 0.01,
        "wa": jax.random.normal(ks[2], (mlp, d_att), jnp.float32) * s(mlp),
        "ba": jax.random.normal(ks[3], (1, d_att), jnp.float32) * 0.01,
        "wv": jax.random.normal(ks[4], (d_att, 1), jnp.float32) * s(d_att),
        "bv": jax.random.normal(ks[5], (1, 1), jnp.float32) * 0.01,
        "wp": jax.random.normal(ks[6], (mlp, n_classes), jnp.float32) * s(mlp),
        "bp": jax.random.normal(ks[7], (1, n_classes), jnp.float32) * 0.01,
    }


def reference_forward(x, p, *, approximate_gelu=False, bf16=False):
    """Pure-JAX reference.  bf16=True mirrors the kernel's mixed precision;
    bf16=False with exact GELU == the PyTorch (f32, erf) semantics."""
    w1 = p["w1"].astype(jnp.bfloat16) if bf16 else p["w1"]
    wa = p["wa"].astype(jnp.bfloat16) if bf16 else p["wa"]
    xx = x.astype(jnp.bfloat16) if bf16 else x
    h = jnp.einsum("bnd,dm->bnm", xx, w1, preferred_element_type=jnp.float32)
    h = _gelu(h + p["b1"], approximate=approximate_gelu)
    hh = h.astype(jnp.bfloat16) if bf16 else h
    ah = jnp.einsum("bnm,ma->bna", hh, wa, preferred_element_type=jnp.float32)
    scores = jnp.tanh(ah + p["ba"]) @ p["wv"] + p["bv"]          # (B, N, 1)
    attn = jax.nn.softmax(scores, axis=1)
    z = jnp.einsum("bnk,bnm->bkm", attn, h)                      # (B, 1, mlp)
    return z @ p["wp"] + p["bp"]                                 # (B, 1, C)


if __name__ == "__main__":
    # Scaled down from (input_dim=1024, mlp_dim=512, D_att=128, n_classes=2).
    # N=250 (not a tile multiple) exercises the pad+mask path; tile_n=64
    # exercises the multi-tile online-softmax accumulator.
    B, N, D_IN, MLP, D_ATT, N_CLASSES = 2, 250, 128, 128, 128, 2

    key = jax.random.PRNGKey(0)
    kx, kp = jax.random.split(key)
    x = jax.random.normal(kx, (B, N, D_IN), jnp.float32)
    params = init_params(kp, D_IN, MLP, D_ATT, N_CLASSES)

    out_tiled = jax.block_until_ready(mil_abmil_forward(x, params, tile_n=64))
    out_auto = jax.block_until_ready(mil_abmil_forward(x, params))  # auto tile

    assert out_tiled.shape == (B, 1, N_CLASSES)
    assert out_auto.shape == (B, 1, N_CLASSES)

    # Tight check vs. a reference mirroring the kernel numerics
    # (bf16 MXU inputs, f32 accumulation, tanh GELU).
    ref_mirror = reference_forward(x, params, approximate_gelu=True, bf16=True)
    assert jnp.allclose(out_tiled, ref_mirror, atol=2e-3, rtol=2e-3), (
        out_tiled, ref_mirror)
    assert jnp.allclose(out_auto, ref_mirror, atol=2e-3, rtol=2e-3), (
        out_auto, ref_mirror)

    # Loose sanity check vs. the exact-f32 / erf-GELU PyTorch semantics
    # (documents the bf16 + tanh-GELU drift).
    ref_exact = reference_forward(x, params, approximate_gelu=False, bf16=False)
    assert jnp.allclose(out_tiled, ref_exact, atol=5e-2, rtol=5e-2), (
        out_tiled, ref_exact)

    print("KERNEL_OK")
</pallas_src>

<mosaic_0001>
module attributes {stable_mosaic.version = 11 : i64} {
  func.func @mil_abmil_kernel(%arg0: i32, %arg1: i32, %arg2: memref<1x64x128xbf16, #tpu.memory_space<vmem>>, %arg3: memref<128x128xbf16, #tpu.memory_space<vmem>>, %arg4: memref<1x128xf32, #tpu.memory_space<vmem>>, %arg5: memref<128x128xbf16, #tpu.memory_space<vmem>>, %arg6: memref<1x128xf32, #tpu.memory_space<vmem>>, %arg7: memref<1x128xf32, #tpu.memory_space<vmem>>, %arg8: memref<128x2xf32, #tpu.memory_space<vmem>>, %arg9: memref<1x2xf32, #tpu.memory_space<vmem>>, %arg10: memref<1x1x2xf32, #tpu.memory_space<vmem>>, %arg11: memref<1x1xf32, #tpu.memory_space<vmem>>, %arg12: memref<1x1xf32, #tpu.memory_space<vmem>>, %arg13: memref<1x128xf32, #tpu.memory_space<vmem>>) attributes {dimension_semantics = [#tpu.dimension_semantics<parallel>, #tpu.dimension_semantics<arbitrary>], iteration_bounds = array<i64: 2, 4>, scalar_prefetch = 0 : i64, scratch_operands = 3 : i64, tpu.core_type = #tpu.core_type<tc>, window_params = [{transform_indices = @transform_0, window_bounds = array<i64: 1, 64, 128>}, {pipeline_mode = #tpu.pipeline_mode<synchronous>, transform_indices = @transform_1, window_bounds = array<i64: 128, 128>}, {pipeline_mode = #tpu.pipeline_mode<synchronous>, transform_indices = @transform_2, window_bounds = array<i64: 1, 128>}, {pipeline_mode = #tpu.pipeline_mode<synchronous>, transform_indices = @transform_3, window_bounds = array<i64: 128, 128>}, {pipeline_mode = #tpu.pipeline_mode<synchronous>, transform_indices = @transform_4, window_bounds = array<i64: 1, 128>}, {pipeline_mode = #tpu.pipeline_mode<synchronous>, transform_indices = @transform_5, window_bounds = array<i64: 1, 128>}, {pipeline_mode = #tpu.pipeline_mode<synchronous>, transform_indices = @transform_6, window_bounds = array<i64: 128, 2>}, {pipeline_mode = #tpu.pipeline_mode<synchronous>, transform_indices = @transform_7, window_bounds = array<i64: 1, 2>}, {transform_indices = @transform_8, window_bounds = array<i64: 1, 1, 2>}]} {
    %c0_i32 = arith.constant 0 : i32
    %0 = arith.cmpi eq, %arg1, %c0_i32 : i32
    %1 = arith.extui %0 : i1 to i32
    %c0_i32_0 = arith.constant 0 : i32
    %2 = arith.cmpi ne, %1, %c0_i32_0 : i32
    scf.if %2 {
      %cst_36 = arith.constant 0xFF800000 : f32
      %68 = vector.broadcast %cst_36 : f32 to vector<1x1xf32>
      %c0_37 = arith.constant 0 : index
      %c0_38 = arith.constant 0 : index
      %69 = vector.load %arg11[%c0_37, %c0_38] : memref<1x1xf32, #tpu.memory_space<vmem>>, vector<1x1xf32>
      tpu.vector_store %arg11[%c0_37, %c0_38], %68 {strides = array<i32>} : memref<1x1xf32, #tpu.memory_space<vmem>>, vector<1x1xf32>,
      %cst_39 = arith.constant 0.000000e+00 : f32
      %70 = vector.broadcast %cst_39 : f32 to vector<1x1xf32>
      %c0_40 = arith.constant 0 : index
      %c0_41 = arith.constant 0 : index
      %71 = vector.load %arg12[%c0_40, %c0_41] : memref<1x1xf32, #tpu.memory_space<vmem>>, vector<1x1xf32>
      tpu.vector_store %arg12[%c0_40, %c0_41], %70 {strides = array<i32>} : memref<1x1xf32, #tpu.memory_space<vmem>>, vector<1x1xf32>,
      %cst_42 = arith.constant 0.000000e+00 : f32
      %72 = vector.broadcast %cst_42 : f32 to vector<1x128xf32>
      %c0_43 = arith.constant 0 : index
      %c0_44 = arith.constant 0 : index
      %73 = vector.load %arg13[%c0_43, %c0_44] : memref<1x128xf32, #tpu.memory_space<vmem>>, vector<1x128xf32>
      tpu.vector_store %arg13[%c0_43, %c0_44], %72 {strides = array<i32>} : memref<1x128xf32, #tpu.memory_space<vmem>>, vector<1x128xf32>,
    } else {
    }
    %c0 = arith.constant 0 : index
    %c0_1 = arith.constant 0 : index
    %c0_2 = arith.constant 0 : index
    %3 = vector.load %arg2[%c0, %c0_1, %c0_2] : memref<1x64x128xbf16, #tpu.memory_space<vmem>>, vector<1x64x128xbf16>
    %4 = vector.shape_cast %3 : vector<1x64x128xbf16> to vector<64x128xbf16>
    %c0_3 = arith.constant 0 : index
    %c0_4 = arith.constant 0 : index
    %5 = vector.load %arg3[%c0_3, %c0_4] : memref<128x128xbf16, #tpu.memory_space<vmem>>, vector<128x128xbf16>
    %cst = arith.constant dense<0.000000e+00> : vector<64x128xf32>
    %6 = tpu.matmul %4, %5, %cst {dimension_numbers = #tpu.dot_dimension_numbers<[1], [0], [0], [1], [0, 0, 1, 1], [], []>} : vector<64x128xbf16>, vector<128x128xbf16>, vector<64x128xf32> -> vector<64x128xf32>
    %c0_5 = arith.constant 0 : index
    %c0_6 = arith.constant 0 : index
    %7 = vector.load %arg4[%c0_5, %c0_6] : memref<1x128xf32, #tpu.memory_space<vmem>>, vector<1x128xf32>
    %8 = vector.broadcast %7 : vector<1x128xf32> to vector<64x128xf32>
    %9 = arith.addf %6, %8 : vector<64x128xf32>
    %10 = arith.mulf %9, %9 : vector<64x128xf32>
    %11 = arith.mulf %9, %10 : vector<64x128xf32>
    %cst_7 = arith.constant 4.471500e-02 : f32
    %12 = vector.broadcast %cst_7 : f32 to vector<64x128xf32>
    %13 = arith.mulf %12, %11 : vector<64x128xf32>
    %14 = arith.addf %9, %13 : vector<64x128xf32>
    %cst_8 = arith.constant 0.797884583 : f32
    %15 = vector.broadcast %cst_8 : f32 to vector<64x128xf32>
    %16 = arith.mulf %15, %14 : vector<64x128xf32>
    %17 = math.tanh %16 : vector<64x128xf32>
    %cst_9 = arith.constant 1.000000e+00 : f32
    %18 = vector.broadcast %cst_9 : f32 to vector<64x128xf32>
    %19 = arith.addf %18, %17 : vector<64x128xf32>
    %cst_10 = arith.constant 5.000000e-01 : f32
    %20 = vector.broadcast %cst_10 : f32 to vector<64x128xf32>
    %21 = arith.mulf %20, %19 : vector<64x128xf32>
    %22 = arith.mulf %9, %21 : vector<64x128xf32>
    %23 = arith.truncf %22 : vector<64x128xf32> to vector<64x128xbf16>
    %c0_11 = arith.constant 0 : index
    %c0_12 = arith.constant 0 : index
    %24 = vector.load %arg5[%c0_11, %c0_12] : memref<128x128xbf16, #tpu.memory_space<vmem>>, vector<128x128xbf16>
    %cst_13 = arith.constant dense<0.000000e+00> : vector<64x128xf32>
    %25 = tpu.matmul %23, %24, %cst_13 {dimension_numbers = #tpu.dot_dimension_numbers<[1], [0], [0], [1], [0, 0, 1, 1], [], []>} : vector<64x128xbf16>, vector<128x128xbf16>, vector<64x128xf32> -> vector<64x128xf32>
    %c0_14 = arith.constant 0 : index
    %c0_15 = arith.constant 0 : index
    %26 = vector.load %arg6[%c0_14, %c0_15] : memref<1x128xf32, #tpu.memory_space<vmem>>, vector<1x128xf32>
    %27 = vector.broadcast %26 : vector<1x128xf32> to vector<64x128xf32>
    %28 = arith.addf %25, %27 : vector<64x128xf32>
    %29 = math.tanh %28 : vector<64x128xf32>
    %c0_16 = arith.constant 0 : index
    %c0_17 = arith.constant 0 : index
    %30 = vector.load %arg7[%c0_16, %c0_17] : memref<1x128xf32, #tpu.memory_space<vmem>>, vector<1x128xf32>
    %31 = vector.broadcast %30 : vector<1x128xf32> to vector<64x128xf32>
    %32 = arith.mulf %29, %31 : vector<64x128xf32>
    %cst_18 = arith.constant dense<0.000000e+00> : vector<64xf32>
    %33 = vector.multi_reduction <add>, %32, %cst_18 [1] : vector<64x128xf32> to vector<64xf32>
    %34 = vector.shape_cast %33 : vector<64xf32> to vector<64x1xf32>
    %35 = tpu.iota {dimensions = array<i32: 0>} : vector<64x1xi32>
    %c64_i32 = arith.constant 64 : i32
    %36 = arith.muli %arg1, %c64_i32 : i32
    %37 = vector.broadcast %36 : i32 to vector<64x1xi32>
    %38 = arith.addi %37, %35 : vector<64x1xi32>
    %c250_i32 = arith.constant 250 : i32
    %39 = vector.broadcast %c250_i32 : i32 to vector<64x1xi32>
    %40 = arith.cmpi slt, %38, %39 : vector<64x1xi32>
    %cst_19 = arith.constant 0xFF800000 : f32
    %41 = vector.broadcast %cst_19 : f32 to vector<64x1xf32>
    %42 = arith.select %40, %34, %41 : vector<64x1xi1>, vector<64x1xf32>
    %c0_20 = arith.constant 0 : index
    %c0_21 = arith.constant 0 : index
    %43 = vector.load %arg11[%c0_20, %c0_21] : memref<1x1xf32, #tpu.memory_space<vmem>>, vector<1x1xf32>
    %cst_22 = arith.constant dense<0xFF800000> : vector<1xf32>
    %44 = vector.multi_reduction <maximumf>, %42, %cst_22 [0] : vector<64x1xf32> to vector<1xf32>
    %45 = vector.shape_cast %44 : vector<1xf32> to vector<1x1xf32>
    %46 = arith.maximumf %43, %45 : vector<1x1xf32>
    %47 = arith.subf %43, %46 : vector<1x1xf32>
    %48 = math.exp %47 : vector<1x1xf32>
    %49 = vector.broadcast %46 : vector<1x1xf32> to vector<64x1xf32>
    %50 = arith.subf %42, %49 : vector<64x1xf32>
    %51 = math.exp %50 : vector<64x1xf32>
    %c0_23 = arith.constant 0 : index
    %c0_24 = arith.constant 0 : index
    %52 = vector.load %arg12[%c0_23, %c0_24] : memref<1x1xf32, #tpu.memory_space<vmem>>, vector<1x1xf32>
    %53 = arith.mulf %48, %52 : vector<1x1xf32>
    %cst_25 = arith.constant dense<0.000000e+00> : vector<1xf32>
    %54 = vector.multi_reduction <add>, %51, %cst_25 [0] : vector<64x1xf32> to vector<1xf32>
    %55 = vector.shape_cast %54 : vector<1xf32> to vector<1x1xf32>
    %56 = arith.addf %53, %55 : vector<1x1xf32>
    %c0_26 = arith.constant 0 : index
    %c0_27 = arith.constant 0 : index
    %57 = vector.load %arg12[%c0_26, %c0_27] : memref<1x1xf32, #tpu.memory_space<vmem>>, vector<1x1xf32>
    tpu.vector_store %arg12[%c0_26, %c0_27], %56 {strides = array<i32>} : memref<1x1xf32, #tpu.memory_space<vmem>>, vector<1x1xf32>,
    %cst_28 = arith.constant dense<0.000000e+00> : vector<1x128xf32>
    %58 = tpu.matmul %51, %22, %cst_28 {dimension_numbers = #tpu.dot_dimension_numbers<[0], [0], [1], [1], [0, 1, 1, 1], [], []>} : vector<64x1xf32>, vector<64x128xf32>, vector<1x128xf32> -> vector<1x128xf32>
    %c0_29 = arith.constant 0 : index
    %c0_30 = arith.constant 0 : index
    %59 = vector.load %arg13[%c0_29, %c0_30] : memref<1x128xf32, #tpu.memory_space<vmem>>, vector<1x128xf32>
    %60 = vector.broadcast %48 : vector<1x1xf32> to vector<1x128xf32>
    %61 = arith.mulf %60, %59 : vector<1x128xf32>
    %62 = arith.addf %61, %58 : vector<1x128xf32>
    %c0_31 = arith.constant 0 : index
    %c0_32 = arith.constant 0 : index
    %63 = vector.load %arg13[%c0_31, %c0_32] : memref<1x128xf32, #tpu.memory_space<vmem>>, vector<1x128xf32>
    tpu.vector_store %arg13[%c0_31, %c0_32], %62 {strides = array<i32>} : memref<1x128xf32, #tpu.memory_space<vmem>>, vector<1x128xf32>,
    %c0_33 = arith.constant 0 : index
    %c0_34 = arith.constant 0 : index
    %64 = vector.load %arg11[%c0_33, %c0_34] : memref<1x1xf32, #tpu.memory_space<vmem>>, vector<1x1xf32>
    tpu.vector_store %arg11[%c0_33, %c0_34], %46 {strides = array<i32>} : memref<1x1xf32, #tpu.memory_space<vmem>>, vector<1x1xf32>,
    %c3_i32 = arith.constant 3 : i32
    %65 = arith.cmpi eq, %arg1, %c3_i32 : i32
    %66 = arith.extui %65 : i1 to i32
    %c0_i32_35 = arith.constant 0 : i32
    %67 = arith.cmpi ne, %66, %c0_i32_35 : i32
    scf.if %67 {
      %c0_36 = arith.constant 0 : index
      %c0_37 = arith.constant 0 : index
      %68 = vector.load %arg13[%c0_36, %c0_37] : memref<1x128xf32, #tpu.memory_space<vmem>>, vector<1x128xf32>
      %c0_38 = arith.constant 0 : index
      %c0_39 = arith.constant 0 : index
      %69 = vector.load %arg12[%c0_38, %c0_39] : memref<1x1xf32, #tpu.memory_space<vmem>>, vector<1x1xf32>
      %70 = vector.broadcast %69 : vector<1x1xf32> to vector<1x128xf32>
      %71 = arith.divf %68, %70 : vector<1x128xf32>
      %c0_40 = arith.constant 0 : index
      %c0_41 = arith.constant 0 : index
      %72 = vector.load %arg8[%c0_40, %c0_41] : memref<128x2xf32, #tpu.memory_space<vmem>>, vector<128x2xf32>
      %cst_42 = arith.constant dense<0.000000e+00> : vector<1x2xf32>
      %73 = tpu.matmul %71, %72, %cst_42 {dimension_numbers = #tpu.dot_dimension_numbers<[1], [0], [0], [1], [0, 0, 1, 1], [], []>} : vector<1x128xf32>, vector<128x2xf32>, vector<1x2xf32> -> vector<1x2xf32>
      %c0_43 = arith.constant 0 : index
      %c0_44 = arith.constant 0 : index
      %74 = vector.load %arg9[%c0_43, %c0_44] : memref<1x2xf32, #tpu.memory_space<vmem>>, vector<1x2xf32>
      %75 = arith.addf %73, %74 : vector<1x2xf32>
      %c0_45 = arith.constant 0 : index
      %c0_46 = arith.constant 0 : index
      %c0_47 = arith.constant 0 : index
      %76 = vector.load %arg10[%c0_45, %c0_46, %c0_47] : memref<1x1x2xf32, #tpu.memory_space<vmem>>, vector<1x1x2xf32>
      %77 = vector.shape_cast %76 : vector<1x1x2xf32> to vector<1x2xf32>
      %78 = vector.shape_cast %75 : vector<1x2xf32> to vector<1x1x2xf32>
      tpu.vector_store %arg10[%c0_45, %c0_46, %c0_47], %78 {strides = array<i32>} : memref<1x1x2xf32, #tpu.memory_space<vmem>>, vector<1x1x2xf32>,
    } else {
    }
    return
  }
  func.func @transform_0(%arg0: i32, %arg1: i32) -> (i32, i32, i32) {
    %c0_i32 = arith.constant 0 : i32
    %c0_i32_0 = arith.constant 0 : i32
    return %arg0, %arg1, %c0_i32 : i32, i32, i32
  }
  func.func @transform_1(%arg0: i32, %arg1: i32) -> (i32, i32) {
    %c0_i32 = arith.constant 0 : i32
    %c0_i32_0 = arith.constant 0 : i32
    %c0_i32_1 = arith.constant 0 : i32
    return %c0_i32, %c0_i32_0 : i32, i32
  }
  func.func @transform_2(%arg0: i32, %arg1: i32) -> (i32, i32) {
    %c0_i32 = arith.constant 0 : i32
    %c0_i32_0 = arith.constant 0 : i32
    %c0_i32_1 = arith.constant 0 : i32
    return %c0_i32, %c0_i32_0 : i32, i32
  }
  func.func @transform_3(%arg0: i32, %arg1: i32) -> (i32, i32) {
    %c0_i32 = arith.constant 0 : i32
    %c0_i32_0 = arith.constant 0 : i32
    %c0_i32_1 = arith.constant 0 : i32
    return %c0_i32, %c0_i32_0 : i32, i32
  }
  func.func @transform_4(%arg0: i32, %arg1: i32) -> (i32, i32) {
    %c0_i32 = arith.constant 0 : i32
    %c0_i32_0 = arith.constant 0 : i32
    %c0_i32_1 = arith.constant 0 : i32
    return %c0_i32, %c0_i32_0 : i32, i32
  }
  func.func @transform_5(%arg0: i32, %arg1: i32) -> (i32, i32) {
    %c0_i32 = arith.constant 0 : i32
    %c0_i32_0 = arith.constant 0 : i32
    %c0_i32_1 = arith.constant 0 : i32
    return %c0_i32, %c0_i32_0 : i32, i32
  }
  func.func @transform_6(%arg0: i32, %arg1: i32) -> (i32, i32) {
    %c0_i32 = arith.constant 0 : i32
    %c0_i32_0 = arith.constant 0 : i32
    %c0_i32_1 = arith.constant 0 : i32
    return %c0_i32, %c0_i32_0 : i32, i32
  }
  func.func @transform_7(%arg0: i32, %arg1: i32) -> (i32, i32) {
    %c0_i32 = arith.constant 0 : i32
    %c0_i32_0 = arith.constant 0 : i32
    %c0_i32_1 = arith.constant 0 : i32
    return %c0_i32, %c0_i32_0 : i32, i32
  }
  func.func @transform_8(%arg0: i32, %arg1: i32) -> (i32, i32, i32) {
    %c0_i32 = arith.constant 0 : i32
    %c0_i32_0 = arith.constant 0 : i32
    %c0_i32_1 = arith.constant 0 : i32
    return %arg0, %c0_i32, %c0_i32_0 : i32, i32, i32
  }
}

</mosaic_0001>

<llo_original>
// kernel: tpu_custom_call.1
$region0: #{tpu_custom_call.1}
  #allocation0 [shape = 'u32[]', space=smem, size = 0x4, offset = 0x4, fixed_abs, tag = 'smem constant byte address 0x4 - core index']
  #allocation1 [shape = 'u32[144,128]{1,0:T(1,128)}', space=vmem, size = 0x12000, scoped, tag = 'internal scratch']
  #allocation2 [shape = 'f32[1,1]{1,0:T(1,128)}', space=vmem, size = 0x200, scoped, tag = 'scratch operand']
  #allocation3 [shape = 'f32[1,1]{1,0:T(1,128)}', space=vmem, size = 0x200, scoped, tag = 'scratch operand']
  #allocation4 [shape = 'f32[1,128]{1,0:T(1,128)}', space=vmem, size = 0x200, scoped, tag = 'scratch operand']
  %s0 = inlined_call_operand.hbm [shape: bf16[2,256,128], index: 0, kind: input, shape index: {}]
  %s1 = inlined_call_operand.vmem [shape: bf16[128,128], index: 1, kind: input, shape index: {}]
  %s2 = inlined_call_operand.vmem [shape: f32[1,128], index: 2, kind: input, shape index: {}]
  %s3 = inlined_call_operand.vmem [shape: bf16[128,128], index: 3, kind: input, shape index: {}]
  %s4 = inlined_call_operand.vmem [shape: f32[1,128], index: 4, kind: input, shape index: {}]
  %s5 = inlined_call_operand.vmem [shape: f32[1,128], index: 5, kind: input, shape index: {}]
  %s6 = inlined_call_operand.vmem [shape: f32[128,2], index: 6, kind: input, shape index: {}]
  %s7 = inlined_call_operand.vmem [shape: f32[1,2], index: 7, kind: input, shape index: {}]
  %s8 = inlined_call_operand.hbm [shape: f32[2,1,2], index: 8, kind: output, shape index: {}]
  %s9 = sld [smem:[#allocation0]]
  $region77: #{tpu_custom_call.1} parent=0
    _
  %s11 = ssub.s32 1, %s9
  %s12 = scalar_select 0, %s11, %s9
  $region1: #{tpu_custom_call.1} parent=0
    #allocation5 [shape = 'u8[32768]{0}', space=vmem, size = 0x8000, scoped, tag = 'input window, operand 0']
    #allocation6 [shape = 's32[2]{0}', space=sflag, size = 0x8, scoped, tag = 'scoped memory for tpu_custom_call.1']
    #allocation7 [shape = 's32[2]{0}', space=sflag, size = 0x8, scoped, tag = 'scoped memory for tpu_custom_call.1']
    #allocation8 [shape = 'u8[1024]{0}', space=vmem, size = 0x400, scoped, tag = 'output window, operand 0']
    %13 = vsyncpa [#allocation6], 0
    %s14 = scalar_lea.sflag [#allocation6], 1
    %15 = vsyncpa %s14, 0
    %16 = vsyncpa [#allocation7], 0
    %s17 = scalar_lea.sflag [#allocation7], 1
    %18 = vsyncpa %s17, 0
    loop: start=0, step=1, limit=10
    $region2: #{tpu_custom_call.1} parent=1 // loop_pre_header
      _
    $region3: #{tpu_custom_call.1} parent=1 // loop_header
      %s20 = sphi 0, %s24
      %p21 = scmp.ge.s32.totalorder %s20, 10
      %s27 = sphi 0, %s39
      %s28 = sphi 0, %s35
      %s29 = sphi 0, %s27
      %s30 = sphi 0, %s28
      %s31 = sphi 0, %s29
      %s32 = sphi 0, %s30
      %s44 = sphi 0, %s46
      %s47 = sphi 0, %s44
      %s48 = sphi 0, %s47
      %s64 = sphi 0, %s48
      %s68 = sphi 0, %s68
      %s70 = sphi 0, %s68
      %s71 = sphi 0, %s70
      %s85 = sphi 0, %s71
      %s89 = sphi 0, %s89
      %s91 = sphi 0, %s89
      %s92 = sphi 0, %s91
      %s106 = sphi 0, %s92
      %s110 = sphi 0, %s110
      %s112 = sphi 0, %s110
      %s113 = sphi 0, %s112
      %s127 = sphi 0, %s113
      %s131 = sphi 0, %s131
      %s133 = sphi 0, %s131
      %s134 = sphi 0, %s133
      %s148 = sphi 0, %s134
      %s152 = sphi 0, %s152
      %s154 = sphi 0, %s152
      %s155 = sphi 0, %s154
      %s169 = sphi 0, %s155
      %s173 = sphi 0, %s173
      %s175 = sphi 0, %s173
      %s176 = sphi 0, %s175
      %s190 = sphi 0, %s176
      %s194 = sphi 0, %s194
      %s196 = sphi 0, %s194
      %s197 = sphi 0, %s196
      %s211 = sphi 0, %s197
      %s217 = sphi 0, %s219
      %s220 = sphi 0, %s217
      %s221 = sphi 0, %s220
      %s237 = sphi 0, %s221
    $region4: #{tpu_custom_call.1} parent=1 // loop_header_branch
      %23 = sbr.rel (%p21) target = $region8
    $region5: #{tpu_custom_call.1} parent=1 // loop_body
      %s25 = ssub.s32 %s20, 1
      %s26 = ssub.s32 %s20, 2
      %s33 = sadd.s32 1, %s28
      %p34 = scmp.ge.s32.totalorder %s33, 4
      %s35 = scalar_select %p34, 0, %s33
      %s36 = sadd.s32 1, %s27
      %s37 = scalar_select %p34, %s36, %s27
      %p38 = scmp.ge.s32.totalorder %s37, 2
      %s39 = scalar_select %p38, 0, %s37
      %s40 = ssub.s32 %s27, %s39
      %s41 = ssub.s32 %s28, %s35
      %s42 = sor.u32 %s40, %s41
      %p43 = scmp.eq.s32.totalorder %s42, 0
      %s45 = sadd.s32 %s44, 1
      %s46 = scalar_select %p43, %s44, %s45
      %p49 = pneg %p43
      %p50 = scmp.eq.s32.totalorder %s20, 7
      %p51 = por %p49, %p50
      %p52 = scmp.ne.s32.totalorder %s44, %s47
      %p53 = scmp.eq.s32.totalorder %s20, 0
      %p54 = por %p52, %p53
      %p55 = scmp.ne.s32.totalorder %s44, %s47
      %p56 = scmp.eq.s32.totalorder %s25, 7
      %p57 = por %p55, %p56
      %p58 = scmp.ne.s32.totalorder %s47, %s48
      %p59 = scmp.eq.s32.totalorder %s25, 0
      %p60 = por %p58, %p59
      %p61 = scmp.ne.s32.totalorder %s47, %s48
      %p62 = scmp.eq.s32.totalorder %s26, 7
      %p63 = por %p61, %p62
      %p65 = scmp.ne.s32.totalorder %s48, %s64
      %p66 = scmp.eq.s32.totalorder %s26, 0
      %p67 = por %p65, %p66
      %s69 = sadd.s32 %s68, 1
      %p72 = scmp.eq.s32.totalorder %s20, 7
      %p73 = scmp.ne.s32.totalorder %s68, %s70
      %p74 = scmp.eq.s32.totalorder %s20, 0
      %p75 = por %p73, %p74
      %p76 = scmp.ne.s32.totalorder %s68, %s70
      %p77 = scmp.eq.s32.totalorder %s25, 7
      %p78 = por %p76, %p77
      %p79 = scmp.ne.s32.totalorder %s70, %s71
      %p80 = scmp.eq.s32.totalorder %s25, 0
      %p81 = por %p79, %p80
      %p82 = scmp.ne.s32.totalorder %s70, %s71
      %p83 = scmp.eq.s32.totalorder %s26, 7
      %p84 = por %p82, %p83
      %p86 = scmp.ne.s32.totalorder %s71, %s85
      %p87 = scmp.eq.s32.totalorder %s26, 0
      %p88 = por %p86, %p87
      %s90 = sadd.s32 %s89, 1
      %p93 = scmp.eq.s32.totalorder %s20, 7
      %p94 = scmp.ne.s32.totalorder %s89, %s91
      %p95 = scmp.eq.s32.totalorder %s20, 0
      %p96 = por %p94, %p95
      %p97 = scmp.ne.s32.totalorder %s89, %s91
      %p98 = scmp.eq.s32.totalorder %s25, 7
      %p99 = por %p97, %p98
      %p100 = scmp.ne.s32.totalorder %s91, %s92
      %p101 = scmp.eq.s32.totalorder %s25, 0
      %p102 = por %p100, %p101
      %p103 = scmp.ne.s32.totalorder %s91, %s92
      %p104 = scmp.eq.s32.totalorder %s26, 7
      %p105 = por %p103, %p104
      %p107 = scmp.ne.s32.totalorder %s92, %s106
      %p108 = scmp.eq.s32.totalorder %s26, 0
      %p109 = por %p107, %p108
      %s111 = sadd.s32 %s110, 1
      %p114 = scmp.eq.s32.totalorder %s20, 7
      %p115 = scmp.ne.s32.totalorder %s110, %s112
      %p116 = scmp.eq.s32.totalorder %s20, 0
      %p117 = por %p115, %p116
      %p118 = scmp.ne.s32.totalorder %s110, %s112
      %p119 = scmp.eq.s32.totalorder %s25, 7
      %p120 = por %p118, %p119
      %p121 = scmp.ne.s32.totalorder %s112, %s113
      %p122 = scmp.eq.s32.totalorder %s25, 0
      %p123 = por %p121, %p122
      %p124 = scmp.ne.s32.totalorder %s112, %s113
      %p125 = scmp.eq.s32.totalorder %s26, 7
      %p126 = por %p124, %p125
      %p128 = scmp.ne.s32.totalorder %s113, %s127
      %p129 = scmp.eq.s32.totalorder %s26, 0
      %p130 = por %p128, %p129
      %s132 = sadd.s32 %s131, 1
      %p135 = scmp.eq.s32.totalorder %s20, 7
      %p136 = scmp.ne.s32.totalorder %s131, %s133
      %p137 = scmp.eq.s32.totalorder %s20, 0
      %p138 = por %p136, %p137
      %p139 = scmp.ne.s32.totalorder %s131, %s133
      %p140 = scmp.eq.s32.totalorder %s25, 7
      %p141 = por %p139, %p140
      %p142 = scmp.ne.s32.totalorder %s133, %s134
      %p143 = scmp.eq.s32.totalorder %s25, 0
      %p144 = por %p142, %p143
      %p145 = scmp.ne.s32.totalorder %s133, %s134
      %p146 = scmp.eq.s32.totalorder %s26, 7
      %p147 = por %p145, %p146
      %p149 = scmp.ne.s32.totalorder %s134, %s148
      %p150 = scmp.eq.s32.totalorder %s26, 0
      %p151 = por %p149, %p150
      %s153 = sadd.s32 %s152, 1
      %p156 = scmp.eq.s32.totalorder %s20, 7
      %p157 = scmp.ne.s32.totalorder %s152, %s154
      %p158 = scmp.eq.s32.totalorder %s20, 0
      %p159 = por %p157, %p158
      %p160 = scmp.ne.s32.totalorder %s152, %s154
      %p161 = scmp.eq.s32.totalorder %s25, 7
      %p162 = por %p160, %p161
      %p163 = scmp.ne.s32.totalorder %s154, %s155
      %p164 = scmp.eq.s32.totalorder %s25, 0
      %p165 = por %p163, %p164
      %p166 = scmp.ne.s32.totalorder %s154, %s155
      %p167 = scmp.eq.s32.totalorder %s26, 7
      %p168 = por %p166, %p167
      %p170 = scmp.ne.s32.totalorder %s155, %s169
      %p171 = scmp.eq.s32.totalorder %s26, 0
      %p172 = por %p170, %p171
      %s174 = sadd.s32 %s173, 1
      %p177 = scmp.eq.s32.totalorder %s20, 7
      %p178 = scmp.ne.s32.totalorder %s173, %s175
      %p179 = scmp.eq.s32.totalorder %s20, 0
      %p180 = por %p178, %p179
      %p181 = scmp.ne.s32.totalorder %s173, %s175
      %p182 = scmp.eq.s32.totalorder %s25, 7
      %p183 = por %p181, %p182
      %p184 = scmp.ne.s32.totalorder %s175, %s176
      %p185 = scmp.eq.s32.totalorder %s25, 0
      %p186 = por %p184, %p185
      %p187 = scmp.ne.s32.totalorder %s175, %s176
      %p188 = scmp.eq.s32.totalorder %s26, 7
      %p189 = por %p187, %p188
      %p191 = scmp.ne.s32.totalorder %s176, %s190
      %p192 = scmp.eq.s32.totalorder %s26, 0
      %p193 = por %p191, %p192
      %s195 = sadd.s32 %s194, 1
      %p198 = scmp.eq.s32.totalorder %s20, 7
      %p199 = scmp.ne.s32.totalorder %s194, %s196
      %p200 = scmp.eq.s32.totalorder %s20, 0
      %p201 = por %p199, %p200
      %p202 = scmp.ne.s32.totalorder %s194, %s196
      %p203 = scmp.eq.s32.totalorder %s25, 7
      %p204 = por %p202, %p203
      %p205 = scmp.ne.s32.totalorder %s196, %s197
      %p206 = scmp.eq.s32.totalorder %s25, 0
      %p207 = por %p205, %p206
      %p208 = scmp.ne.s32.totalorder %s196, %s197
      %p209 = scmp.eq.s32.totalorder %s26, 7
      %p210 = por %p208, %p209
      %p212 = scmp.ne.s32.totalorder %s197, %s211
      %p213 = scmp.eq.s32.totalorder %s26, 0
      %p214 = por %p212, %p213
      %s215 = ssub.s32 %s27, %s39
      %p216 = scmp.eq.s32.totalorder %s215, 0
      %s218 = sadd.s32 %s217, 1
      %s219 = scalar_select %p216, %s217, %s218
      %p222 = pneg %p216
      %p223 = scmp.eq.s32.totalorder %s20, 7
      %p224 = por %p222, %p223
      %p225 = scmp.ne.s32.totalorder %s217, %s220
      %p226 = scmp.eq.s32.totalorder %s20, 0
      %p227 = por %p225, %p226
      %p228 = scmp.ne.s32.totalorder %s217, %s220
      %p229 = scmp.eq.s32.totalorder %s25, 7
      %p230 = por %p228, %p229
      %p231 = scmp.ne.s32.totalorder %s220, %s221
      %p232 = scmp.eq.s32.totalorder %s25, 0
      %p233 = por %p231, %p232
      %p234 = scmp.ne.s32.totalorder %s220, %s221
      %p235 = scmp.eq.s32.totalorder %s26, 7
      %p236 = por %p234, %p235
      %p238 = scmp.ne.s32.totalorder %s221, %s237
      %p239 = scmp.eq.s32.totalorder %s26, 0
      %p240 = por %p238, %p239
      %p241 = scmp.le.s32.totalorder 1, %s20
      %p242 = scmp.lt.s32.totalorder %s20, 9
      %p243 = pnand %p241, %p242
      %p244 = pneg %p243
      // Predicated region
      $region9: #{tpu_custom_call.1} parent=5 // pred_check
        _
      $region10: #{tpu_custom_call.1} parent=5 // pred_check_branch
        %246 = sbr.rel (%p243) target = $region12
      $region11: #{tpu_custom_call.1} parent=5 // pred_region
        %s247 = ssub.s32 %s20, 1
        // Predicated region
        $region13: #{tpu_custom_call.1} parent=11 // pred_check
          %p248 = pneg %p81
        $region14: #{tpu_custom_call.1} parent=11 // pred_check_branch
          %250 = sbr.rel (%p248) target = $region16
        $region15: #{tpu_custom_call.1} parent=11 // pred_region
          _
        $region16: #{tpu_custom_call.1} parent=11 // pred_fallthru
          _
        // Predicated region
        $region17: #{tpu_custom_call.1} parent=11 // pred_check
          %p251 = pneg %p102
        $region18: #{tpu_custom_call.1} parent=11 // pred_check_branch
          %253 = sbr.rel (%p251) target = $region20
        $region19: #{tpu_custom_call.1} parent=11 // pred_region
          _
        $region20: #{tpu_custom_call.1} parent=11 // pred_fallthru
          _
        // Predicated region
        $region21: #{tpu_custom_call.1} parent=11 // pred_check
          %p254 = pneg %p123
        $region22: #{tpu_custom_call.1} parent=11 // pred_check_branch
          %256 = sbr.rel (%p254) target = $region24
        $region23: #{tpu_custom_call.1} parent=11 // pred_region
          _
        $region24: #{tpu_custom_call.1} parent=11 // pred_fallthru
          _
        // Predicated region
        $region25: #{tpu_custom_call.1} parent=11 // pred_check
          %p257 = pneg %p144
        $region26: #{tpu_custom_call.1} parent=11 // pred_check_branch
          %259 = sbr.rel (%p257) target = $region28
        $region27: #{tpu_custom_call.1} parent=11 // pred_region
          _
        $region28: #{tpu_custom_call.1} parent=11 // pred_fallthru
          _
        // Predicated region
        $region29: #{tpu_custom_call.1} parent=11 // pred_check
          %p260 = pneg %p165
        $region30: #{tpu_custom_call.1} parent=11 // pred_check_branch
          %262 = sbr.rel (%p260) target = $region32
        $region31: #{tpu_custom_call.1} parent=11 // pred_region
          _
        $region32: #{tpu_custom_call.1} parent=11 // pred_fallthru
          _
        // Predicated region
        $region33: #{tpu_custom_call.1} parent=11 // pred_check
          %p263 = pneg %p186
        $region34: #{tpu_custom_call.1} parent=11 // pred_check_branch
          %265 = sbr.rel (%p263) target = $region36
        $region35: #{tpu_custom_call.1} parent=11 // pred_region
          _
        $region36: #{tpu_custom_call.1} parent=11 // pred_fallthru
          _
        // Predicated region
        $region37: #{tpu_custom_call.1} parent=11 // pred_check
          %p266 = pneg %p207
        $region38: #{tpu_custom_call.1} parent=11 // pred_check_branch
          %268 = sbr.rel (%p266) target = $region40
        $region39: #{tpu_custom_call.1} parent=11 // pred_region
          _
        $region40: #{tpu_custom_call.1} parent=11 // pred_fallthru
          _
      $region12: #{tpu_custom_call.1} parent=5 // pred_fallthru
        _
      %p269 = scmp.lt.s32.totalorder %s20, 8
      // Predicated region
      $region41: #{tpu_custom_call.1} parent=5 // pred_check
        %p270 = pneg %p269
      $region42: #{tpu_custom_call.1} parent=5 // pred_check_branch
        %272 = sbr.rel (%p270) target = $region44
      $region43: #{tpu_custom_call.1} parent=5 // pred_region
        // Predicated region
        $region45: #{tpu_custom_call.1} parent=43 // pred_check
          %p273 = pneg %p54
        $region46: #{tpu_custom_call.1} parent=43 // pred_check_branch
          %275 = sbr.rel (%p273) target = $region48
        $region47: #{tpu_custom_call.1} parent=43 // pred_region
          %s276 = sand.u32 %s44, 1
          %s277 = scalar_lea.sflag [#allocation6], %s276
          %s278 = sand.u32 %s44, 1
          %s279 = smul.addr %s278, 32
          %s280 = scalar_lea.vmem [#allocation5], %s279
          %s281 = smul.u32 8, %s28
          %s283 = ssub.s32 512, 512
          %284 = vsyncadd %s277, %s283
          %s285 = smul.addr %s27, 32
          %s286 = sadd.s32 %s281, %s285
          %s287 = smul.addr %s286, 64
          %s288 = scalar_lea.hbm %s0, %s287
          %s289 = sshll.u32 %s280, 4
          %s290 = int_to_ptr.vmem [resolvable:$true] %s289
          %295 = dma.hbm_to_vmem [thread:$0]  %s288, 512, %s290, %s277, 64, 64, 4
        $region48: #{tpu_custom_call.1} parent=43 // pred_fallthru
          _
      $region44: #{tpu_custom_call.1} parent=5 // pred_fallthru
        _
      %p296 = scmp.le.s32.totalorder 1, %s20
      %p297 = scmp.lt.s32.totalorder %s20, 9
      %p298 = pnand %p296, %p297
      %p299 = pneg %p298
      // Predicated region
      $region49: #{tpu_custom_call.1} parent=5 // pred_check
        _
      $region50: #{tpu_custom_call.1} parent=5 // pred_check_branch
        %301 = sbr.rel (%p298) target = $region52
      $region51: #{tpu_custom_call.1} parent=5 // pred_region
        %s302 = ssub.s32 %s20, 1
        %s303 = sand.u32 %s47, 1
        %s304 = scalar_lea.sflag [#allocation6], %s303
        %s305 = sand.u32 %s47, 1
        %s306 = smul.addr %s305, 32
        %s307 = scalar_lea.vmem [#allocation5], %s306
        // Predicated region
        $region53: #{tpu_custom_call.1} parent=51 // pred_check
          %p308 = pneg %p60
        $region54: #{tpu_custom_call.1} parent=51 // pred_check_branch
          %310 = sbr.rel (%p308) target = $region56
        $region55: #{tpu_custom_call.1} parent=51 // pred_region
          %311 = dma.done %s304, 512
        $region56: #{tpu_custom_call.1} parent=51 // pred_fallthru
          _
        %s312 = sand.u32 %s47, 1
        %s313 = scalar_lea.sflag [#allocation6], %s312
        %s314 = sand.u32 %s47, 1
        %s315 = smul.addr %s314, 32
        %s316 = scalar_lea.vmem [#allocation5], %s315
        %p317 = pneg %p60
        %p318 = pneg %p57
        %p319 = pneg %p81
        %p320 = pneg %p78
        %p321 = pneg %p102
        %p322 = pneg %p99
        %p323 = pneg %p123
        %p324 = pneg %p120
        %p325 = pneg %p144
        %p326 = pneg %p141
        %p327 = pneg %p165
        %p328 = pneg %p162
        %p329 = pneg %p186
        %p330 = pneg %p183
        %p331 = pneg %p207
        %p332 = pneg %p204
        %p333 = pneg %p233
        %p334 = pneg %p230
        %s335 = sand.u32 %s220, 1
        %s336 = scalar_lea.sflag [#allocation7], %s335
        %s337 = sand.u32 %s220, 1
        %s338 = scalar_lea.vmem [#allocation8], %s337
        %s339 = smul.u32 8, %s30
        %p341 = scmp.eq.s32.totalorder %s30, 0
        // Predicated region
        $region57: #{tpu_custom_call.1} parent=51 // pred_check
          %p342 = pneg %p341
        $region58: #{tpu_custom_call.1} parent=51 // pred_check_branch
          %344 = sbr.rel (%p342) target = $region60
        $region59: #{tpu_custom_call.1} parent=51 // pred_region
          %vm345 = vcmask 0
          %346 = vst.msk [vmem:[#allocation2] sm:$0x1] %vm345, -inf
          %347 = vst.msk [vmem:[#allocation3] sm:$0x1] %vm345, 0.0
          %348 = vst [vmem:[#allocation4] sm:$0x1] 0.0
        $region60: #{tpu_custom_call.1} parent=51 // pred_fallthru
          _
        %v349 = vld [vmem:[%s307] sm:$0xf]
        %v350 = vld [vmem:[%s307 + $0x4] sm:$0xf]
        %v351 = vld [vmem:[%s307 + $0x8] sm:$0xf]
        %v352 = vld [vmem:[%s307 + $0xc] sm:$0xf]
        %v353 = vld [vmem:[%s307 + $0x10] sm:$0xf]
        %v354 = vld [vmem:[%s307 + $0x14] sm:$0xf]
        %v355 = vld [vmem:[%s307 + $0x18] sm:$0xf]
        %v356 = vld [vmem:[%s307 + $0x1c] sm:$0xf]
        %v357 = vld [vmem:[%s1] sm:$0xf]
        %v358 = vld [vmem:[%s1 + $0x4] sm:$0xf]
        %v359 = vld [vmem:[%s1 + $0x8] sm:$0xf]
        %v360 = vld [vmem:[%s1 + $0xc] sm:$0xf]
        %v361 = vld [vmem:[%s1 + $0x10] sm:$0xf]
        %v362 = vld [vmem:[%s1 + $0x14] sm:$0xf]
        %v363 = vld [vmem:[%s1 + $0x18] sm:$0xf]
        %v364 = vld [vmem:[%s1 + $0x1c] sm:$0xf]
        %v365 = vld [vmem:[%s1 + $0x20] sm:$0xf]
        %v366 = vld [vmem:[%s1 + $0x24] sm:$0xf]
        %v367 = vld [vmem:[%s1 + $0x28] sm:$0xf]
        %v368 = vld [vmem:[%s1 + $0x2c] sm:$0xf]
        %v369 = vld [vmem:[%s1 + $0x30] sm:$0xf]
        %v370 = vld [vmem:[%s1 + $0x34] sm:$0xf]
        %v371 = vld [vmem:[%s1 + $0x38] sm:$0xf]
        %v372 = vld [vmem:[%s1 + $0x3c] sm:$0xf]
        %v373 = vld [vmem:[%s2] sm:$0x1]
        %v375 = vlaneseq
        %v376 = vshrl.u32 %v375, 7
        %v377 = vsub.s32 0, %v376
        %v378 = vrot.slane %v373, %v377
        %v388 = vunpack.c.l.b16 %v349
        %v389 = vunpack.c.l.b16 %v350
        %v390 = vunpack.c.l.b16 %v351
        %v391 = vunpack.c.l.b16 %v352
        %v392 = vunpack.c.l.b16 %v353
        %v393 = vunpack.c.l.b16 %v354
        %v394 = vunpack.c.l.b16 %v355
        %v395 = vunpack.c.l.b16 %v356
        %v396 = vpack.c.b16 %v389, %v388
        %v397 = vpack.c.b16 %v391, %v390
        %v398 = vpack.c.b16 %v393, %v392
        %v399 = vpack.c.b16 %v395, %v394
        %v420 = vunpack.c.l.b16 %v357
        %v421 = vunpack.c.l.b16 %v358
        %v422 = vunpack.c.l.b16 %v359
        %v423 = vunpack.c.l.b16 %v360
        %v424 = vunpack.c.l.b16 %v361
        %v425 = vunpack.c.l.b16 %v362
        %v426 = vunpack.c.l.b16 %v363
        %v427 = vunpack.c.l.b16 %v364
        %v428 = vunpack.c.l.b16 %v365
        %v429 = vunpack.c.l.b16 %v366
        %v430 = vunpack.c.l.b16 %v367
        %v431 = vunpack.c.l.b16 %v368
        %v432 = vunpack.c.l.b16 %v369
        %v433 = vunpack.c.l.b16 %v370
        %v434 = vunpack.c.l.b16 %v371
        %v435 = vunpack.c.l.b16 %v372
        %v436 = vpack.c.b16 %v421, %v420
        %v437 = vpack.c.b16 %v423, %v422
        %v438 = vpack.c.b16 %v425, %v424
        %v439 = vpack.c.b16 %v427, %v426
        %v440 = vpack.c.b16 %v429, %v428
        %v441 = vpack.c.b16 %v431, %v430
        %v442 = vpack.c.b16 %v433, %v432
        %v443 = vpack.c.b16 %v435, %v434
        %452 = vmatprep.subr.bf16.mxu0 0
        %453 = vmatpush1.bf16.msra.mxu0 %v436
        %454 = vmatprep.subr.bf16.mxu0 0
        %455 = vmatpush1.bf16.msra.mxu0 %v437
        %456 = vmatprep.subr.bf16.mxu0 0
        %457 = vmatpush1.bf16.msra.mxu0 %v438
        %458 = vmatprep.subr.bf16.mxu0 0
        %459 = vmatpush1.bf16.msra.mxu0 %v439
        %460 = vmatprep.subr.bf16.mxu0 0
        %461 = vmatpush1.bf16.msra.mxu0 %v440
        %462 = vmatprep.subr.bf16.mxu0 0
        %463 = vmatpush1.bf16.msra.mxu0 %v441
        %464 = vmatprep.subr.bf16.mxu0 0
        %465 = vmatpush1.bf16.msra.mxu0 %v442
        %466 = vmatprep.subr.bf16.mxu0 0
        %467 = vmatpush1.bf16.msra.mxu0 %v443
        %468 = vmatprep.subr.bf16.mxu0 0
        %469 = vmatpush1.bf16.msra.mxu0 0
        %470 = vmatprep.subr.bf16.mxu0 0
        %471 = vmatpush1.bf16.msra.mxu0 0
        %472 = vmatprep.subr.bf16.mxu0 0
        %473 = vmatpush1.bf16.msra.mxu0 0
        %474 = vmatprep.subr.bf16.mxu0 0
        %475 = vmatpush1.bf16.msra.mxu0 0
        %476 = vmatprep.subr.bf16.mxu0 0
        %477 = vmatpush1.bf16.msra.mxu0 0
        %478 = vmatprep.subr.bf16.mxu0 0
        %479 = vmatpush1.bf16.msra.mxu0 0
        %480 = vmatprep.subr.bf16.mxu0 0
        %481 = vmatpush1.bf16.msra.mxu0 0
        %482 = vmatprep.subr.bf16.mxu0 0
        %483 = vmatpush1.bf16.msra.mxu0 0
        %484 = vmatprep.mubr.bf16.mxu0 0
        %485 = vmatmul.mubr.bf16.gmra.mrb[0].mxu0 %v396
        %v486 = vpop.f32.mrb[0].mxu0
        %v487 = vadd.f32 %v378, %v486
        %v488 = vpop.f32.mrb[0].mxu0
        %v489 = vpop.f32.mrb[0].mxu0
        %v490 = vadd.f32 %v378, %v489
        %v491 = vpop.f32.mrb[0].mxu0
        %492 = vmatprep.mubr.bf16.mxu0 0
        %493 = vmatmul.mubr.bf16.gmra.mrb[0].mxu0 %v397
        %v494 = vpop.f32.mrb[0].mxu0
        %v495 = vadd.f32 %v378, %v494
        %v496 = vpop.f32.mrb[0].mxu0
        %v497 = vpop.f32.mrb[0].mxu0
        %v498 = vadd.f32 %v378, %v497
        %v499 = vpop.f32.mrb[0].mxu0
        %500 = vmatprep.mubr.bf16.mxu0 0
        %501 = vmatmul.mubr.bf16.gmra.mrb[0].mxu0 %v398
        %v502 = vpop.f32.mrb[0].mxu0
        %v503 = vadd.f32 %v378, %v502
        %v504 = vpop.f32.mrb[0].mxu0
        %v505 = vpop.f32.mrb[0].mxu0
        %v506 = vadd.f32 %v378, %v505
        %v507 = vpop.f32.mrb[0].mxu0
        %508 = vmatprep.mubr.bf16.mxu0 0
        %509 = vmatmul.mubr.bf16.gmra.mrb[0].mxu0 %v399
        %v510 = vpop.f32.mrb[0].mxu0
        %v511 = vadd.f32 %v378, %v510
        %v512 = vpop.f32.mrb[0].mxu0
        %v513 = vpop.f32.mrb[0].mxu0
        %v514 = vadd.f32 %v378, %v513
        %v515 = vpop.f32.mrb[0].mxu0
        %516 = vdwg.mxu0
        %v517 = vmul.f32 %v487, %v487
        %v518 = vmul.f32 %v490, %v490
        %v519 = vmul.f32 %v495, %v495
        %v520 = vmul.f32 %v498, %v498
        %v521 = vmul.f32 %v503, %v503
        %v522 = vmul.f32 %v506, %v506
        %v523 = vmul.f32 %v511, %v511
        %v524 = vmul.f32 %v514, %v514
        %v525 = vmul.f32 %v487, %v517
        %v526 = vmul.f32 %v490, %v518
        %v527 = vmul.f32 %v495, %v519
        %v528 = vmul.f32 %v498, %v520
        %v529 = vmul.f32 %v503, %v521
        %v530 = vmul.f32 %v506, %v522
        %v531 = vmul.f32 %v511, %v523
        %v532 = vmul.f32 %v514, %v524
        %v533 = vmul.f32 %v525, 0.044715
        %v534 = vmul.f32 %v526, 0.044715
        %v535 = vmul.f32 %v527, 0.044715
        %v536 = vmul.f32 %v528, 0.044715
        %v537 = vmul.f32 %v529, 0.044715
        %v538 = vmul.f32 %v530, 0.044715
        %v539 = vmul.f32 %v531, 0.044715
        %v540 = vmul.f32 %v532, 0.044715
        %v541 = vadd.f32 %v487, %v533
        %v542 = vadd.f32 %v490, %v534
        %v543 = vadd.f32 %v495, %v535
        %v544 = vadd.f32 %v498, %v536
        %v545 = vadd.f32 %v503, %v537
        %v546 = vadd.f32 %v506, %v538
        %v547 = vadd.f32 %v511, %v539
        %v548 = vadd.f32 %v514, %v540
        %v549 = vmul.f32 %v541, 0.7978846
        %v550 = vmul.f32 %v542, 0.7978846
        %v551 = vmul.f32 %v543, 0.7978846
        %v552 = vmul.f32 %v544, 0.7978846
        %v553 = vmul.f32 %v545, 0.7978846
        %v554 = vmul.f32 %v546, 0.7978846
        %v555 = vmul.f32 %v547, 0.7978846
        %v556 = vmul.f32 %v548, 0.7978846
        %v557 = vtanh.pop %v549
        %v558 = vtanh.pop %v550
        %v559 = vtanh.pop %v551
        %v560 = vtanh.pop %v552
        %v561 = vtanh.pop %v553
        %v562 = vtanh.pop %v554
        %v563 = vtanh.pop %v555
        %v564 = vtanh.pop %v556
        %v565 = vadd.f32 %v557, 1.0
        %v566 = vadd.f32 %v558, 1.0
        %v567 = vadd.f32 %v559, 1.0
        %v568 = vadd.f32 %v560, 1.0
        %v569 = vadd.f32 %v561, 1.0
        %v570 = vadd.f32 %v562, 1.0
        %v571 = vadd.f32 %v563, 1.0
        %v572 = vadd.f32 %v564, 1.0
        %v573 = vmul.f32 %v565, 0.5
        %v574 = vmul.f32 %v566, 0.5
        %v575 = vmul.f32 %v567, 0.5
        %v576 = vmul.f32 %v568, 0.5
        %v577 = vmul.f32 %v569, 0.5
        %v578 = vmul.f32 %v570, 0.5
        %v579 = vmul.f32 %v571, 0.5
        %v580 = vmul.f32 %v572, 0.5
        %v581 = vmul.f32 %v487, %v573
        %v582 = vmul.f32 %v490, %v574
        %v583 = vmul.f32 %v495, %v575
        %v584 = vmul.f32 %v498, %v576
        %v585 = vmul.f32 %v503, %v577
        %v586 = vmul.f32 %v506, %v578
        %v587 = vmul.f32 %v511, %v579
        %v588 = vmul.f32 %v514, %v580
        %v589 = vpack.c.bf16 %v582, %v581
        %v590 = vpack.c.bf16 %v584, %v583
        %v591 = vpack.c.bf16 %v586, %v585
        %v592 = vpack.c.bf16 %v588, %v587
        %v593 = vld [vmem:[%s3] sm:$0xf]
        %v594 = vld [vmem:[%s3 + $0x4] sm:$0xf]
        %v595 = vld [vmem:[%s3 + $0x8] sm:$0xf]
        %v596 = vld [vmem:[%s3 + $0xc] sm:$0xf]
        %v597 = vld [vmem:[%s3 + $0x10] sm:$0xf]
        %v598 = vld [vmem:[%s3 + $0x14] sm:$0xf]
        %v599 = vld [vmem:[%s3 + $0x18] sm:$0xf]
        %v600 = vld [vmem:[%s3 + $0x1c] sm:$0xf]
        %v601 = vld [vmem:[%s3 + $0x20] sm:$0xf]
        %v602 = vld [vmem:[%s3 + $0x24] sm:$0xf]
        %v603 = vld [vmem:[%s3 + $0x28] sm:$0xf]
        %v604 = vld [vmem:[%s3 + $0x2c] sm:$0xf]
        %v605 = vld [vmem:[%s3 + $0x30] sm:$0xf]
        %v606 = vld [vmem:[%s3 + $0x34] sm:$0xf]
        %v607 = vld [vmem:[%s3 + $0x38] sm:$0xf]
        %v608 = vld [vmem:[%s3 + $0x3c] sm:$0xf]
        %v609 = vld [vmem:[%s4] sm:$0x1]
        %v611 = vlaneseq
        %v612 = vshrl.u32 %v611, 7
        %v613 = vsub.s32 0, %v612
        %v614 = vrot.slane %v609, %v613
        %v632 = vunpack.c.l.b16 %v593
        %v633 = vunpack.c.l.b16 %v594
        %v634 = vunpack.c.l.b16 %v595
        %v635 = vunpack.c.l.b16 %v596
        %v636 = vunpack.c.l.b16 %v597
        %v637 = vunpack.c.l.b16 %v598
        %v638 = vunpack.c.l.b16 %v599
        %v639 = vunpack.c.l.b16 %v600
        %v640 = vunpack.c.l.b16 %v601
        %v641 = vunpack.c.l.b16 %v602
        %v642 = vunpack.c.l.b16 %v603
        %v643 = vunpack.c.l.b16 %v604
        %v644 = vunpack.c.l.b16 %v605
        %v645 = vunpack.c.l.b16 %v606
        %v646 = vunpack.c.l.b16 %v607
        %v647 = vunpack.c.l.b16 %v608
        %v648 = vpack.c.b16 %v633, %v632
        %v649 = vpack.c.b16 %v635, %v634
        %v650 = vpack.c.b16 %v637, %v636
        %v651 = vpack.c.b16 %v639, %v638
        %v652 = vpack.c.b16 %v641, %v640
        %v653 = vpack.c.b16 %v643, %v642
        %v654 = vpack.c.b16 %v645, %v644
        %v655 = vpack.c.b16 %v647, %v646
        %664 = vmatprep.subr.bf16.mxu0 0
        %665 = vmatpush1.bf16.msra.mxu0 %v648
        %666 = vmatprep.subr.bf16.mxu0 0
        %667 = vmatpush1.bf16.msra.mxu0 %v649
        %668 = vmatprep.subr.bf16.mxu0 0
        %669 = vmatpush1.bf16.msra.mxu0 %v650
        %670 = vmatprep.subr.bf16.mxu0 0
        %671 = vmatpush1.bf16.msra.mxu0 %v651
        %672 = vmatprep.subr.bf16.mxu0 0
        %673 = vmatpush1.bf16.msra.mxu0 %v652
        %674 = vmatprep.subr.bf16.mxu0 0
        %675 = vmatpush1.bf16.msra.mxu0 %v653
        %676 = vmatprep.subr.bf16.mxu0 0
        %677 = vmatpush1.bf16.msra.mxu0 %v654
        %678 = vmatprep.subr.bf16.mxu0 0
        %679 = vmatpush1.bf16.msra.mxu0 %v655
        %680 = vmatprep.subr.bf16.mxu0 0
        %681 = vmatpush1.bf16.msra.mxu0 0
        %682 = vmatprep.subr.bf16.mxu0 0
        %683 = vmatpush1.bf16.msra.mxu0 0
        %684 = vmatprep.subr.bf16.mxu0 0
        %685 = vmatpush1.bf16.msra.mxu0 0
        %686 = vmatprep.subr.bf16.mxu0 0
        %687 = vmatpush1.bf16.msra.mxu0 0
        %688 = vmatprep.subr.bf16.mxu0 0
        %689 = vmatpush1.bf16.msra.mxu0 0
        %690 = vmatprep.subr.bf16.mxu0 0
        %691 = vmatpush1.bf16.msra.mxu0 0
        %692 = vmatprep.subr.bf16.mxu0 0
        %693 = vmatpush1.bf16.msra.mxu0 0
        %694 = vmatprep.subr.bf16.mxu0 0
        %695 = vmatpush1.bf16.msra.mxu0 0
        %696 = vmatprep.mubr.bf16.mxu0 0
        %697 = vmatmul.mubr.bf16.gmra.mrb[0].mxu0 %v589
        %v698 = vpop.f32.mrb[0].mxu0
        %v699 = vadd.f32 %v614, %v698
        %v700 = vpop.f32.mrb[0].mxu0
        %v701 = vpop.f32.mrb[0].mxu0
        %v702 = vadd.f32 %v614, %v701
        %v703 = vpop.f32.mrb[0].mxu0
        %704 = vmatprep.mubr.bf16.mxu0 0
        %705 = vmatmul.mubr.bf16.gmra.mrb[0].mxu0 %v590
        %v706 = vpop.f32.mrb[0].mxu0
        %v707 = vadd.f32 %v614, %v706
        %v708 = vpop.f32.mrb[0].mxu0
        %v709 = vpop.f32.mrb[0].mxu0
        %v710 = vadd.f32 %v614, %v709
        %v711 = vpop.f32.mrb[0].mxu0
        %712 = vmatprep.mubr.bf16.mxu0 0
        %713 = vmatmul.mubr.bf16.gmra.mrb[0].mxu0 %v591
        %v714 = vpop.f32.mrb[0].mxu0
        %v715 = vadd.f32 %v614, %v714
        %v716 = vpop.f32.mrb[0].mxu0
        %v717 = vpop.f32.mrb[0].mxu0
        %v718 = vadd.f32 %v614, %v717
        %v719 = vpop.f32.mrb[0].mxu0
        %720 = vmatprep.mubr.bf16.mxu0 0
        %721 = vmatmul.mubr.bf16.gmra.mrb[0].mxu0 %v592
        %v722 = vpop.f32.mrb[0].mxu0
        %v723 = vadd.f32 %v614, %v722
        %v724 = vpop.f32.mrb[0].mxu0
        %v725 = vpop.f32.mrb[0].mxu0
        %v726 = vadd.f32 %v614, %v725
        %v727 = vpop.f32.mrb[0].mxu0
        %728 = vdwg.mxu0
        %v729 = vtanh.pop %v699
        %v730 = vtanh.pop %v702
        %v731 = vtanh.pop %v707
        %v732 = vtanh.pop %v710
        %v733 = vtanh.pop %v715
        %v734 = vtanh.pop %v718
        %v735 = vtanh.pop %v723
        %v736 = vtanh.pop %v726
        %v737 = vld [vmem:[%s5] sm:$0x1]
        %v739 = vlaneseq
        %v740 = vshrl.u32 %v739, 7
        %v741 = vsub.s32 0, %v740
        %v742 = vrot.slane %v737, %v741
        %v744 = vmul.f32 %v729, %v742
        %v745 = vmul.f32 %v730, %v742
        %v746 = vmul.f32 %v731, %v742
        %v747 = vmul.f32 %v732, %v742
        %v748 = vmul.f32 %v733, %v742
        %v749 = vmul.f32 %v734, %v742
        %v750 = vmul.f32 %v735, %v742
        %v751 = vmul.f32 %v736, %v742
        %752 = vadd.xlane.f32.xlu0 %v744
        %v753 = vpop.xlane.xlu0 %752
        %754 = vadd.xlane.f32.xlu0 %v745
        %v755 = vpop.xlane.xlu0 %754
        %756 = vadd.xlane.f32.xlu0 %v746
        %v757 = vpop.xlane.xlu0 %756
        %758 = vadd.xlane.f32.xlu0 %v747
        %v759 = vpop.xlane.xlu0 %758
        %760 = vadd.xlane.f32.xlu0 %v748
        %v761 = vpop.xlane.xlu0 %760
        %762 = vadd.xlane.f32.xlu0 %v749
        %v763 = vpop.xlane.xlu0 %762
        %764 = vadd.xlane.f32.xlu0 %v750
        %v765 = vpop.xlane.xlu0 %764
        %766 = vadd.xlane.f32.xlu0 %v751
        %v767 = vpop.xlane.xlu0 %766
        %v768 = vlaneseq
        %v769 = vshrl.u32 %v768, 7
        %v770 = vadd.s32 %v769, 8
        %v771 = vadd.s32 %v769, 16
        %v772 = vadd.s32 %v769, 24
        %v773 = vadd.s32 %v769, 32
        %v774 = vadd.s32 %v769, 40
        %v775 = vadd.s32 %v769, 48
        %v776 = vadd.s32 %v769, 56
        %s777 = smul.u32 %s30, 64
        %v778 = vstv %s777
        %v779 = vadd.s32 %v778, %v769
        %v780 = vadd.s32 %v778, %v770
        %v781 = vadd.s32 %v778, %v771
        %v782 = vadd.s32 %v778, %v772
        %v783 = vadd.s32 %v778, %v773
        %v784 = vadd.s32 %v778, %v774
        %v785 = vadd.s32 %v778, %v775
        %v786 = vadd.s32 %v778, %v776
        %vm787 = vcmp.lt.s32.totalorder %v779, 250
        %vm788 = vcmp.lt.s32.totalorder %v780, 250
        %vm789 = vcmp.lt.s32.totalorder %v781, 250
        %vm790 = vcmp.lt.s32.totalorder %v782, 250
        %vm791 = vcmp.lt.s32.totalorder %v783, 250
        %vm792 = vcmp.lt.s32.totalorder %v784, 250
        %vm793 = vcmp.lt.s32.totalorder %v785, 250
        %vm794 = vcmp.lt.s32.totalorder %v786, 250
        %v795 = vsel %vm787, %v753, -inf
        %v796 = vsel %vm788, %v755, -inf
        %v797 = vsel %vm789, %v757, -inf
        %v798 = vsel %vm790, %v759, -inf
        %v799 = vsel %vm791, %v761, -inf
        %v800 = vsel %vm792, %v763, -inf
        %v801 = vsel %vm793, %v765, -inf
        %v802 = vsel %vm794, %v767, -inf
        %v803 = vld [vmem:[#allocation2] sm:$0x1]
        %v804 = vmax.f32 %v795, %v799
        %v805 = vmax.f32 %v796, %v800
        %v806 = vmax.f32 %v797, %v801
        %v807 = vmax.f32 %v798, %v802
        %v808 = vmax.f32 %v804, %v805
        %v809 = vmax.f32 %v806, %v807
        %v810 = vmax.f32 %v808, %v809
        %v811 = vrot.slane %v810, 4
        %v812 = vmax.f32 %v810, %v811
        %v813 = vrot.slane %v812, 2
        %v814 = vmax.f32 %v812, %v813
        %v815 = vrot.slane %v814, 1
        %v816 = vmax.f32 %v814, %v815
        %v817 = vmax.f32 %v803, %v816
        %v818 = vsub.f32 %v803, %v817
        %v819 = vmul.f32 %v818, 1.442695
        %v820 = vpow.pop %v819
        %v822 = vlaneseq
        %v823 = vshrl.u32 %v822, 7
        %v824 = vsub.s32 0, %v823
        %v825 = vrot.slane %v817, %v824
        %v827 = vsub.f32 %v795, %v825
        %v828 = vsub.f32 %v796, %v825
        %v829 = vsub.f32 %v797, %v825
        %v830 = vsub.f32 %v798, %v825
        %v831 = vsub.f32 %v799, %v825
        %v832 = vsub.f32 %v800, %v825
        %v833 = vsub.f32 %v801, %v825
        %v834 = vsub.f32 %v802, %v825
        %v835 = vmul.f32 %v827, 1.442695
        %v836 = vpow.pop %v835
        %v837 = vmul.f32 %v828, 1.442695
        %v838 = vpow.pop %v837
        %v839 = vmul.f32 %v829, 1.442695
        %v840 = vpow.pop %v839
        %v841 = vmul.f32 %v830, 1.442695
        %v842 = vpow.pop %v841
        %v843 = vmul.f32 %v831, 1.442695
        %v844 = vpow.pop %v843
        %v845 = vmul.f32 %v832, 1.442695
        %v846 = vpow.pop %v845
        %v847 = vmul.f32 %v833, 1.442695
        %v848 = vpow.pop %v847
        %v849 = vmul.f32 %v834, 1.442695
        %v850 = vpow.pop %v849
        %v851 = vld [vmem:[#allocation3] sm:$0x1]
        %v852 = vmul.f32 %v820, %v851
        %vm853 = vcmask 7168
        %v854 = vsel %vm853, %v836, 0.0
        %v855 = vsel %vm853, %v838, 0.0
        %v856 = vadd.f32 %v854, %v855
        %v857 = vsel %vm853, %v840, 0.0
        %v858 = vadd.f32 %v856, %v857
        %v859 = vsel %vm853, %v842, 0.0
        %v860 = vadd.f32 %v858, %v859
        %v861 = vsel %vm853, %v844, 0.0
        %v862 = vadd.f32 %v860, %v861
        %v863 = vsel %vm853, %v846, 0.0
        %v864 = vadd.f32 %v862, %v863
        %v865 = vsel %vm853, %v848, 0.0
        %v866 = vadd.f32 %v864, %v865
        %v867 = vsel %vm853, %v850, 0.0
        %v868 = vadd.f32 %v866, %v867
        %v869 = vrot.slane %v868, 4
        %v870 = vadd.f32 %v868, %v869
        %v871 = vrot.slane %v870, 2
        %v872 = vadd.f32 %v870, %v871
        %v873 = vrot.slane %v872, 1
        %v874 = vadd.f32 %v872, %v873
        %v875 = vadd.f32 %v852, %v874
        %vm876 = vcmask 0
        %877 = vst.msk [vmem:[#allocation3] sm:$0x1] %vm876, %v875
        %878 = vxpose.xlu0.b32.start [1/16] %v836, 128
        %879 = vxpose.xlu0.b32.cont [2/16] %v838, 128
        %880 = vxpose.xlu0.b32.cont [3/16] %v840, 128
        %881 = vxpose.xlu0.b32.cont [4/16] %v842, 128
        %882 = vxpose.xlu0.b32.cont [5/16] %v844, 128
        %883 = vxpose.xlu0.b32.cont [6/16] %v846, 128
        %884 = vxpose.xlu0.b32.cont [7/16] %v848, 128
        %885 = vxpose.xlu0.b32.cont [8/16] %v850, 128
        %886 = vxpose.xlu0.b32.cont [9/16] 0.0, 128
        %887 = vxpose.xlu0.b32.cont [10/16] 0.0, 128
        %888 = vxpose.xlu0.b32.cont [11/16] 0.0, 128
        %889 = vxpose.xlu0.b32.cont [12/16] 0.0, 128
        %890 = vxpose.xlu0.b32.cont [13/16] 0.0, 128
        %891 = vxpose.xlu0.b32.cont [14/16] 0.0, 128
        %892 = vxpose.xlu0.b32.cont [15/16] 0.0, 128
        %893 = vxpose.xlu0.b32.end [16/16] 0.0, 128
        %v894 = vpop.trf.xlu0
        %v895 = vpop.trf.xlu0
        %v896 = vpop.trf.xlu0
        %v897 = vpop.trf.xlu0
        %v898 = vpop.trf.xlu0
        %v899 = vpop.trf.xlu0
        %v900 = vpop.trf.xlu0
        %v901 = vpop.trf.xlu0
        %v902 = vpop.trf.xlu0
        %v903 = vpop.trf.xlu0
        %v904 = vpop.trf.xlu0
        %v905 = vpop.trf.xlu0
        %v906 = vpop.trf.xlu0
        %v907 = vpop.trf.xlu0
        %v908 = vpop.trf.xlu0
        %v909 = vpop.trf.xlu0
        %vm910 = vcmask 523264
        %v912 = vsel %vm910, %v894, 0
        %914 = vmatprep.subr.mxu0 0.0
        %915 = vmatpush1.msra.mxu0 %v581
        %916 = vmatprep.subr.mxu0 0.0
        %917 = vmatpush1.msra.mxu0 %v582
        %918 = vmatprep.subr.mxu0 0.0
        %919 = vmatpush1.msra.mxu0 %v583
        %920 = vmatprep.subr.mxu0 0.0
        %921 = vmatpush1.msra.mxu0 %v584
        %922 = vmatprep.subr.mxu0 0.0
        %923 = vmatpush1.msra.mxu0 %v585
        %924 = vmatprep.subr.mxu0 0.0
        %925 = vmatpush1.msra.mxu0 %v586
        %926 = vmatprep.subr.mxu0 0.0
        %927 = vmatpush1.msra.mxu0 %v587
        %928 = vmatprep.subr.mxu0 0.0
        %929 = vmatpush1.msra.mxu0 %v588
        %930 = vmatprep.subr.mxu0 0.0
        %931 = vmatpush1.msra.mxu0 0.0
        %932 = vmatprep.subr.mxu0 0.0
        %933 = vmatpush1.msra.mxu0 0.0
        %934 = vmatprep.subr.mxu0 0.0
        %935 = vmatpush1.msra.mxu0 0.0
        %936 = vmatprep.subr.mxu0 0.0
        %937 = vmatpush1.msra.mxu0 0.0
        %938 = vmatprep.subr.mxu0 0.0
        %939 = vmatpush1.msra.mxu0 0.0
        %940 = vmatprep.subr.mxu0 0.0
        %941 = vmatpush1.msra.mxu0 0.0
        %942 = vmatprep.subr.mxu0 0.0
        %943 = vmatpush1.msra.mxu0 0.0
        %944 = vmatprep.subr.mxu0 0.0
        %945 = vmatpush1.msra.mxu0 0.0
        %946 = vmatprep.subr.mxu0 0.0
        %947 = vmatpush1.msra.mxu0 0.0
        %948 = vmatprep.subr.mxu0 0.0
        %949 = vmatpush1.msra.mxu0 0.0
        %950 = vmatprep.subr.mxu0 0.0
        %951 = vmatpush1.msra.mxu0 0.0
        %952 = vmatprep.subr.mxu0 0.0
        %953 = vmatpush1.msra.mxu0 0.0
        %954 = vmatprep.subr.mxu0 0.0
        %955 = vmatpush1.msra.mxu0 0.0
        %956 = vmatprep.subr.mxu0 0.0
        %957 = vmatpush1.msra.mxu0 0.0
        %958 = vmatprep.subr.mxu0 0.0
        %959 = vmatpush1.msra.mxu0 0.0
        %960 = vmatprep.subr.mxu0 0.0
        %961 = vmatpush1.msra.mxu0 0.0
        %962 = vmatprep.subr.mxu0 0.0
        %963 = vmatpush1.msra.mxu0 0.0
        %964 = vmatprep.subr.mxu0 0.0
        %965 = vmatpush1.msra.mxu0 0.0
        %966 = vmatprep.subr.mxu0 0.0
        %967 = vmatpush1.msra.mxu0 0.0
        %968 = vmatprep.subr.mxu0 0.0
        %969 = vmatpush1.msra.mxu0 0.0
        %970 = vmatprep.subr.mxu0 0.0
        %971 = vmatpush1.msra.mxu0 0.0
        %972 = vmatprep.subr.mxu0 0.0
        %973 = vmatpush1.msra.mxu0 0.0
        %974 = vmatprep.subr.mxu0 0.0
        %975 = vmatpush1.msra.mxu0 0.0
        %976 = vmatprep.subr.mxu0 0.0
        %977 = vmatpush1.msra.mxu0 0.0
        %978 = vmatprep.mubr.f32.mxu0 0.0
        %979 = vmatmul.mubr.f32.gmra.mrb[0].mxu0 %v912
        %v980 = vpop.f32.mrb[0].mxu0
        %v981 = vadd.f32 0.0, %v980
        %v982 = vpop.f32.mrb[0].mxu0
        %983 = vdwg.mxu0
        %v984 = vld [vmem:[#allocation4] sm:$0x1]
        %986 = vset.pattern.permute.xlu0 0
        %987 = vperm.xlu0 %986, %v820
        %v988 = vpop.permute.xlu0 %987
        %v990 = vlaneseq
        %v991 = vshrl.u32 %v990, 7
        %v992 = vsub.s32 0, %v991
        %v993 = vrot.slane %v988, %v992
        %v994 = vmul.f32 %v993, %v984
        %v995 = vadd.f32 %v994, %v981
        %996 = vst [vmem:[#allocation4] sm:$0x1] %v995
        %997 = vst.msk [vmem:[#allocation2] sm:$0x1] %vm876, %v817
        %p998 = scmp.eq.s32.totalorder %s30, 3
        // Predicated region
        $region61: #{tpu_custom_call.1} parent=51 // pred_check
          %p999 = pneg %p998
        $region62: #{tpu_custom_call.1} parent=51 // pred_check_branch
          %1001 = sbr.rel (%p999) target = $region64
        $region63: #{tpu_custom_call.1} parent=51 // pred_region
          %v1002 = vld [vmem:[#allocation4] sm:$0x1]
          %v1003 = vld [vmem:[#allocation3] sm:$0x1]
          %1005 = vset.pattern.permute.xlu0 0
          %1006 = vperm.xlu0 %1005, %v1003
          %v1007 = vpop.permute.xlu0 %1006
          %v1009 = vlaneseq
          %v1010 = vshrl.u32 %v1009, 7
          %v1011 = vsub.s32 0, %v1010
          %v1012 = vrot.slane %v1007, %v1011
          %v1013 = vrcp.pop %v1012
          %v1014 = vmul.f32 %v1002, %v1013
          %v1015 = vld [vmem:[%s6] sm:$0xff]
          %v1016 = vld [vmem:[%s6 + $0x8] sm:$0xff]
          %v1017 = vld [vmem:[%s6 + $0x10] sm:$0xff]
          %v1018 = vld [vmem:[%s6 + $0x18] sm:$0xff]
          %v1019 = vld [vmem:[%s6 + $0x20] sm:$0xff]
          %v1020 = vld [vmem:[%s6 + $0x28] sm:$0xff]
          %v1021 = vld [vmem:[%s6 + $0x30] sm:$0xff]
          %v1022 = vld [vmem:[%s6 + $0x38] sm:$0xff]
          %v1023 = vld [vmem:[%s6 + $0x40] sm:$0xff]
          %v1024 = vld [vmem:[%s6 + $0x48] sm:$0xff]
          %v1025 = vld [vmem:[%s6 + $0x50] sm:$0xff]
          %v1026 = vld [vmem:[%s6 + $0x58] sm:$0xff]
          %v1027 = vld [vmem:[%s6 + $0x60] sm:$0xff]
          %v1028 = vld [vmem:[%s6 + $0x68] sm:$0xff]
          %v1029 = vld [vmem:[%s6 + $0x70] sm:$0xff]
          %v1030 = vld [vmem:[%s6 + $0x78] sm:$0xff]
          %v1031 = vld [vmem:[%s7] sm:$0x1]
          %1032 = vmatprep.subr.mxu0 0.0
          %1033 = vmatpush1.msra.mxu0 %v1015
          %1034 = vmatprep.subr.mxu0 0.0
          %1035 = vmatpush1.msra.mxu0 %v1016
          %1036 = vmatprep.subr.mxu0 0.0
          %1037 = vmatpush1.msra.mxu0 %v1017
          %1038 = vmatprep.subr.mxu0 0.0
          %1039 = vmatpush1.msra.mxu0 %v1018
          %1040 = vmatprep.subr.mxu0 0.0
          %1041 = vmatpush1.msra.mxu0 %v1019
          %1042 = vmatprep.subr.mxu0 0.0
          %1043 = vmatpush1.msra.mxu0 %v1020
          %1044 = vmatprep.subr.mxu0 0.0
          %1045 = vmatpush1.msra.mxu0 %v1021
          %1046 = vmatprep.subr.mxu0 0.0
          %1047 = vmatpush1.msra.mxu0 %v1022
          %1048 = vmatprep.subr.mxu0 0.0
          %1049 = vmatpush1.msra.mxu0 %v1023
          %1050 = vmatprep.subr.mxu0 0.0
          %1051 = vmatpush1.msra.mxu0 %v1024
          %1052 = vmatprep.subr.mxu0 0.0
          %1053 = vmatpush1.msra.mxu0 %v1025
          %1054 = vmatprep.subr.mxu0 0.0
          %1055 = vmatpush1.msra.mxu0 %v1026
          %1056 = vmatprep.subr.mxu0 0.0
          %1057 = vmatpush1.msra.mxu0 %v1027
          %1058 = vmatprep.subr.mxu0 0.0
          %1059 = vmatpush1.msra.mxu0 %v1028
          %1060 = vmatprep.subr.mxu0 0.0
          %1061 = vmatpush1.msra.mxu0 %v1029
          %1062 = vmatprep.subr.mxu0 0.0
          %1063 = vmatpush1.msra.mxu0 %v1030
          %1064 = vmatprep.subr.mxu0 0.0
          %1065 = vmatpush1.msra.mxu0 0.0
          %1066 = vmatprep.subr.mxu0 0.0
          %1067 = vmatpush1.msra.mxu0 0.0
          %1068 = vmatprep.subr.mxu0 0.0
          %1069 = vmatpush1.msra.mxu0 0.0
          %1070 = vmatprep.subr.mxu0 0.0
          %1071 = vmatpush1.msra.mxu0 0.0
          %1072 = vmatprep.subr.mxu0 0.0
          %1073 = vmatpush1.msra.mxu0 0.0
          %1074 = vmatprep.subr.mxu0 0.0
          %1075 = vmatpush1.msra.mxu0 0.0
          %1076 = vmatprep.subr.mxu0 0.0
          %1077 = vmatpush1.msra.mxu0 0.0
          %1078 = vmatprep.subr.mxu0 0.0
          %1079 = vmatpush1.msra.mxu0 0.0
          %1080 = vmatprep.subr.mxu0 0.0
          %1081 = vmatpush1.msra.mxu0 0.0
          %1082 = vmatprep.subr.mxu0 0.0
          %1083 = vmatpush1.msra.mxu0 0.0
          %1084 = vmatprep.subr.mxu0 0.0
          %1085 = vmatpush1.msra.mxu0 0.0
          %1086 = vmatprep.subr.mxu0 0.0
          %1087 = vmatpush1.msra.mxu0 0.0
          %1088 = vmatprep.subr.mxu0 0.0
          %1089 = vmatpush1.msra.mxu0 0.0
          %1090 = vmatprep.subr.mxu0 0.0
          %1091 = vmatpush1.msra.mxu0 0.0
          %1092 = vmatprep.subr.mxu0 0.0
          %1093 = vmatpush1.msra.mxu0 0.0
          %1094 = vmatprep.subr.mxu0 0.0
          %1095 = vmatpush1.msra.mxu0 0.0
          %1096 = vmatprep.mubr.f32.mxu0 0.0
          %1097 = vmatmul.mubr.f32.gmra.mrb[0].mxu0 %v1014
          %v1098 = vpop.f32.mrb[0].mxu0
          %v1099 = vadd.f32 %v1031, %v1098
          %v1100 = vpop.f32.mrb[0].mxu0
          %1101 = vdwg.mxu0
          %vm1102 = vcmask 8192
          %1103 = vst.msk [vmem:[%s338] sm:$0x1] %vm1102, %v1099
        $region64: #{tpu_custom_call.1} parent=51 // pred_fallthru
          _
        %s1104 = sand.u32 %s220, 1
        %s1105 = scalar_lea.sflag [#allocation7], %s1104
        %s1106 = sand.u32 %s220, 1
        %s1107 = scalar_lea.vmem [#allocation8], %s1106
        // Predicated region
        $region65: #{tpu_custom_call.1} parent=51 // pred_check
          %p1108 = pneg %p230
        $region66: #{tpu_custom_call.1} parent=51 // pred_check_branch
          %1110 = sbr.rel (%p1108) target = $region68
        $region67: #{tpu_custom_call.1} parent=51 // pred_region
          %s1112 = ssub.s32 16, 16
          %1113 = vsyncadd %s1105, %s1112
          %s1114 = smul.addr %s29, 16
          %s1115 = scalar_lea.hbm %s8, %s1114
          %s1117 = sshll.u32 %s1107, 4
          %s1118 = int_to_ptr.vmem [resolvable:$true] %s1117
          %1120 = dma.vmem_to_hbm [thread:$0]  %s1118, 16, %s1115, %s1105
        $region68: #{tpu_custom_call.1} parent=51 // pred_fallthru
          _
      $region52: #{tpu_custom_call.1} parent=5 // pred_fallthru
        _
      %p1121 = scmp.le.s32.totalorder 2, %s20
      // Predicated region
      $region69: #{tpu_custom_call.1} parent=5 // pred_check
        %p1122 = pneg %p1121
      $region70: #{tpu_custom_call.1} parent=5 // pred_check_branch
        %1124 = sbr.rel (%p1122) target = $region72
      $region71: #{tpu_custom_call.1} parent=5 // pred_region
        %s1125 = ssub.s32 %s20, 2
        // Predicated region
        $region73: #{tpu_custom_call.1} parent=71 // pred_check
          %p1126 = pneg %p236
        $region74: #{tpu_custom_call.1} parent=71 // pred_check_branch
          %1128 = sbr.rel (%p1126) target = $region76
        $region75: #{tpu_custom_call.1} parent=71 // pred_region
          %s1129 = sand.u32 %s221, 1
          %s1130 = scalar_lea.sflag [#allocation7], %s1129
          %s1131 = sand.u32 %s221, 1
          %s1132 = scalar_lea.vmem [#allocation8], %s1131
          %1133 = dma.done %s1130, 16
        $region76: #{tpu_custom_call.1} parent=71 // pred_fallthru
          _
      $region72: #{tpu_custom_call.1} parent=5 // pred_fallthru
        _
    $region6: #{tpu_custom_call.1} parent=1 // loop_footer
      %s24 = sadd.s32 1, %s20
    $region7: #{tpu_custom_call.1} parent=1 // loop_footer_branch
      %19 = sbr.rel target = $region3
    $region8: #{tpu_custom_call.1} parent=1 // loop_exit
      _
    %1134 = vsyncpa [#allocation6], 1
    %s1135 = scalar_lea.sflag [#allocation6], 1
    %1136 = vsyncpa %s1135, 1
    %1137 = vsyncpa [#allocation7], 1
    %s1138 = scalar_lea.sflag [#allocation7], 1
    %1139 = vsyncpa %s1138, 1

</llo_original>
